<compile_context>
chip_gen: v6e
topology: v6e:2x2x1
jax: 0.10.0
libtpu: 0.0.40
codegen_flags: <defaults>
</compile_context>

<pallas_src>
import functools

import jax
import jax.numpy as jnp
from jax.experimental import pallas as pl
from jax.experimental.pallas import tpu as pltpu


def _round_up(x, m):
    return ((x + m - 1) // m) * m


def ncf_kernel(n_fc, *refs):
    """Feature-major NCF forward for one batch tile.

    refs = (umlp, imlp, umf, imf,              # activations, (feat, tile_b)
            w0_u, w0_i, b0,                    # first FC layer (concat split)
            [w_l, b_l] * (n_fc - 1),           # remaining FC layers
            wa_mlp, wa_mf, ba,                 # affine head
            out)                               # (1, tile_b)
    """
    umlp_ref, imlp_ref, umf_ref, imf_ref = refs[0:4]
    i = 4

    # ---- FC layer 0: cat([u, i]) @ W0  ==  W0_u^T @ u_T + W0_i^T @ i_T --------
    # bf16 MXU operands, f32 accumulate; feature-major result (L1, tile_b).
    w0u_ref, w0i_ref, b0_ref = refs[i], refs[i + 1], refs[i + 2]
    i += 3
    h = jnp.dot(w0u_ref[...], umlp_ref[...], preferred_element_type=jnp.float32)
    h = h + jnp.dot(w0i_ref[...], imlp_ref[...], preferred_element_type=jnp.float32)
    h = jnp.maximum(h + b0_ref[...], 0.0)          # f32 (L1, tile_b)

    # ---- remaining FC layers + ReLU (bias/ReLU in f32 on the VPU) -------------
    for _ in range(1, n_fc):
        w_ref, b_ref = refs[i], refs[i + 1]
        i += 2
        h32 = jnp.dot(w_ref[...], h.astype(jnp.bfloat16),
                      preferred_element_type=jnp.float32)
        h = jnp.maximum(h32 + b_ref[...], 0.0)     # f32 (L_l, tile_b)

    # ---- GMF branch: element-wise product, full lane occupancy (VPU, f32) ----
    mf = umf_ref[...] * imf_ref[...]               # (d_mf, tile_b)

    # ---- affine head: broadcast-multiply + sublane (XLU) reduce ---------------
    wa_mlp_ref, wa_mf_ref, ba_ref = refs[i], refs[i + 1], refs[i + 2]
    i += 3
    logits = (
        jnp.sum(h * wa_mlp_ref[...], axis=0, keepdims=True)
        + jnp.sum(mf * wa_mf_ref[...], axis=0, keepdims=True)
        + ba_ref[...]
    )                                              # (1, tile_b) f32

    # ---- sigmoid (EUP) + lane-dense unmasked store ----------------------------
    out_ref = refs[i]
    out_ref[...] = jax.nn.sigmoid(logits)


def init_params(key, config):
    """Deterministic synthetic parameters (shapes follow the torch module)."""
    num_users = config["num_users"]
    num_items = config["num_items"]
    d_mlp = config["latent_dim_mlp"]
    d_mf = config["latent_dim_mf"]
    layers = config["layers"]
    assert layers[0] == 2 * d_mlp

    keys = jax.random.split(key, 16)
    ki = iter(keys)

    params = {
        "emb_user_mlp": jax.random.normal(next(ki), (num_users, d_mlp), jnp.float32),
        "emb_item_mlp": jax.random.normal(next(ki), (num_items, d_mlp), jnp.float32),
        "emb_user_mf": jax.random.normal(next(ki), (num_users, d_mf), jnp.float32),
        "emb_item_mf": jax.random.normal(next(ki), (num_items, d_mf), jnp.float32),
        "fc_w": [],  # stored as (in, out)
        "fc_b": [],  # stored as (1, out)
    }
    for in_size, out_size in zip(layers[:-1], layers[1:]):
        params["fc_w"].append(
            0.1 * jax.random.normal(next(ki), (in_size, out_size), jnp.float32)
        )
        params["fc_b"].append(
            0.1 * jax.random.normal(next(ki), (1, out_size), jnp.float32)
        )
    affine_in = layers[-1] + d_mf
    params["affine_w"] = 0.1 * jax.random.normal(next(ki), (affine_in, 1), jnp.float32)
    params["affine_b"] = 0.1 * jax.random.normal(next(ki), (1, 1), jnp.float32)
    return params


def prepare_params(params, config):
    """One-time reshaping of torch-style params into the kernel's feature-major
    layout: transposed tables/weights, bf16 MXU operands, f32 element-wise path."""
    d_mlp = config["latent_dim_mlp"]
    layers = config["layers"]
    n_fc = len(layers) - 1
    l_last = layers[-1]

    w0_t = params["fc_w"][0].T                                 # (L1, 2*d_mlp)
    return {
        "emb_user_mlp_T": params["emb_user_mlp"].T.astype(jnp.bfloat16),
        "emb_item_mlp_T": params["emb_item_mlp"].T.astype(jnp.bfloat16),
        "emb_user_mf_T": params["emb_user_mf"].T,              # f32 (VPU path)
        "emb_item_mf_T": params["emb_item_mf"].T,
        "w0_uT": w0_t[:, :d_mlp].astype(jnp.bfloat16),         # (L1, d_mlp)
        "w0_iT": w0_t[:, d_mlp:].astype(jnp.bfloat16),         # (L1, d_mlp)
        "b0_col": params["fc_b"][0].T,                         # (L1, 1) f32
        "fc_wT": [params["fc_w"][l].T.astype(jnp.bfloat16) for l in range(1, n_fc)],
        "fc_b_col": [params["fc_b"][l].T for l in range(1, n_fc)],
        "wa_mlp_col": params["affine_w"][:l_last],             # (L_last, 1) f32
        "wa_mf_col": params["affine_w"][l_last:],              # (d_mf, 1) f32
        "ba": params["affine_b"],                              # (1, 1) f32
    }


def ncf_forward(kparams, config, user_indices, item_indices):
    d_mlp = config["latent_dim_mlp"]
    d_mf = config["latent_dim_mf"]
    layers = config["layers"]
    n_fc = len(layers) - 1
    batch = user_indices.shape[0]

    # ---- batch tiling: big lane-aligned tiles; num_tiles >= 2 for v7x megacore
    # once batch exceeds the cap.  Per-tile VMEM footprint is only a few MB.
    tile_b = min(4096, _round_up(batch, 128))
    num_tiles = pl.cdiv(batch, tile_b)
    b_pad = num_tiles * tile_b

    # ---- pad the cheap int32 index vectors (with 0 = valid row), NOT the
    # gathered activations; avoids extra HBM passes over (B, feat) arrays.
    u_idx = jnp.pad(user_indices.astype(jnp.int32), (0, b_pad - batch))
    i_idx = jnp.pad(item_indices.astype(jnp.int32), (0, b_pad - batch))

    # ---- feature-major gathers straight out of the pre-transposed tables ------
    # TODO(synk): fuse these gathers into the kernel via scalar-prefetched indices.
    umlp = jnp.take(kparams["emb_user_mlp_T"], u_idx, axis=1)   # (d_mlp, b_pad) bf16
    imlp = jnp.take(kparams["emb_item_mlp_T"], i_idx, axis=1)   # (d_mlp, b_pad) bf16
    umf = jnp.take(kparams["emb_user_mf_T"], u_idx, axis=1)     # (d_mf, b_pad) f32
    imf = jnp.take(kparams["emb_item_mf_T"], i_idx, axis=1)     # (d_mf, b_pad) f32

    # ---- specs: activations tiled along the batch/lane axis, params resident --
    act_spec = lambda feat: pl.BlockSpec((feat, tile_b), lambda b: (0, b))
    const_spec = lambda arr: pl.BlockSpec(arr.shape, lambda b: (0,) * arr.ndim)

    kernel_inputs = [umlp, imlp, umf, imf,
                     kparams["w0_uT"], kparams["w0_iT"], kparams["b0_col"]]
    in_specs = [act_spec(d_mlp), act_spec(d_mlp), act_spec(d_mf), act_spec(d_mf),
                const_spec(kparams["w0_uT"]), const_spec(kparams["w0_iT"]),
                const_spec(kparams["b0_col"])]
    for w, b in zip(kparams["fc_wT"], kparams["fc_b_col"]):
        kernel_inputs += [w, b]
        in_specs += [const_spec(w), const_spec(b)]
    kernel_inputs += [kparams["wa_mlp_col"], kparams["wa_mf_col"], kparams["ba"]]
    in_specs += [const_spec(kparams["wa_mlp_col"]),
                 const_spec(kparams["wa_mf_col"]),
                 const_spec(kparams["ba"])]

    out = pl.pallas_call(
        functools.partial(ncf_kernel, n_fc),
        out_shape=jax.ShapeDtypeStruct((1, b_pad), jnp.float32),
        grid=(num_tiles,),
        in_specs=in_specs,
        out_specs=pl.BlockSpec((1, tile_b), lambda b: (0, b)),
        compiler_params=pltpu.CompilerParams(
            dimension_semantics=("parallel",),
        ),
    )(*kernel_inputs)

    # Lane-dense row -> (batch, 1) rating.
    return out[0, :batch].reshape(batch, 1)


def ncf_reference(params, config, user_indices, item_indices):
    """Pure-JAX f32 reference matching the PyTorch forward."""
    umlp = params["emb_user_mlp"][user_indices]
    imlp = params["emb_item_mlp"][item_indices]
    umf = params["emb_user_mf"][user_indices]
    imf = params["emb_item_mf"][item_indices]
    x = jnp.concatenate([umlp, imlp], axis=-1)
    for w, b in zip(params["fc_w"], params["fc_b"]):
        x = jnp.maximum(x @ w + b, 0.0)
    vec = jnp.concatenate([x, umf * imf], axis=-1)
    logits = vec @ params["affine_w"] + params["affine_b"]
    return jax.nn.sigmoid(logits)


if __name__ == "__main__":
    config = {
        "num_users": 32,
        "num_items": 48,
        "latent_dim_mf": 8,
        "latent_dim_mlp": 16,
        "layers": [32, 64, 32, 16],  # layers[0] == 2 * latent_dim_mlp
        "pretrained_ebdg": False,
        "load_checkpoint": False,
    }
    batch = 8

    key = jax.random.PRNGKey(0)
    k_params, k_user, k_item = jax.random.split(key, 3)
    params = init_params(k_params, config)
    kparams = prepare_params(params, config)

    user_indices = jax.random.randint(k_user, (batch,), 0, config["num_users"])
    item_indices = jax.random.randint(k_item, (batch,), 0, config["num_items"])

    rating = ncf_forward(kparams, config, user_indices, item_indices)
    rating = jax.block_until_ready(rating)

    ref = ncf_reference(params, config, user_indices, item_indices)

    assert rating.shape == (batch, 1)
    assert bool(jnp.all((rating >= 0.0) & (rating <= 1.0)))
    assert bool(jnp.all(jnp.abs(rating - ref) < 5e-2)), "mismatch vs f32 reference"
    print("KERNEL_OK")
</pallas_src>

<mosaic_0001>
module attributes {stable_mosaic.version = 11 : i64} {
  func.func @ncf_kernel(%arg0: i32, %arg1: memref<16x128xbf16, #tpu.memory_space<vmem>>, %arg2: memref<16x128xbf16, #tpu.memory_space<vmem>>, %arg3: memref<8x128xf32, #tpu.memory_space<vmem>>, %arg4: memref<8x128xf32, #tpu.memory_space<vmem>>, %arg5: memref<64x16xbf16, #tpu.memory_space<vmem>>, %arg6: memref<64x16xbf16, #tpu.memory_space<vmem>>, %arg7: memref<64x1xf32, #tpu.memory_space<vmem>>, %arg8: memref<32x64xbf16, #tpu.memory_space<vmem>>, %arg9: memref<32x1xf32, #tpu.memory_space<vmem>>, %arg10: memref<16x32xbf16, #tpu.memory_space<vmem>>, %arg11: memref<16x1xf32, #tpu.memory_space<vmem>>, %arg12: memref<16x1xf32, #tpu.memory_space<vmem>>, %arg13: memref<8x1xf32, #tpu.memory_space<vmem>>, %arg14: memref<1x1xf32, #tpu.memory_space<vmem>>, %arg15: memref<1x128xf32, #tpu.memory_space<vmem>>) attributes {dimension_semantics = [#tpu.dimension_semantics<parallel>], iteration_bounds = array<i64: 1>, scalar_prefetch = 0 : i64, scratch_operands = 0 : i64, tpu.core_type = #tpu.core_type<tc>, window_params = [{transform_indices = @transform_0, window_bounds = array<i64: 16, 128>}, {transform_indices = @transform_1, window_bounds = array<i64: 16, 128>}, {transform_indices = @transform_2, window_bounds = array<i64: 8, 128>}, {transform_indices = @transform_3, window_bounds = array<i64: 8, 128>}, {pipeline_mode = #tpu.pipeline_mode<synchronous>, transform_indices = @transform_4, window_bounds = array<i64: 64, 16>}, {pipeline_mode = #tpu.pipeline_mode<synchronous>, transform_indices = @transform_5, window_bounds = array<i64: 64, 16>}, {pipeline_mode = #tpu.pipeline_mode<synchronous>, transform_indices = @transform_6, window_bounds = array<i64: 64, 1>}, {pipeline_mode = #tpu.pipeline_mode<synchronous>, transform_indices = @transform_7, window_bounds = array<i64: 32, 64>}, {pipeline_mode = #tpu.pipeline_mode<synchronous>, transform_indices = @transform_8, window_bounds = array<i64: 32, 1>}, {pipeline_mode = #tpu.pipeline_mode<synchronous>, transform_indices = @transform_9, window_bounds = array<i64: 16, 32>}, {pipeline_mode = #tpu.pipeline_mode<synchronous>, transform_indices = @transform_10, window_bounds = array<i64: 16, 1>}, {pipeline_mode = #tpu.pipeline_mode<synchronous>, transform_indices = @transform_11, window_bounds = array<i64: 16, 1>}, {pipeline_mode = #tpu.pipeline_mode<synchronous>, transform_indices = @transform_12, window_bounds = array<i64: 8, 1>}, {pipeline_mode = #tpu.pipeline_mode<synchronous>, transform_indices = @transform_13, window_bounds = array<i64: 1, 1>}, {transform_indices = @transform_14, window_bounds = array<i64: 1, 128>}]} {
    %c0 = arith.constant 0 : index
    %c0_0 = arith.constant 0 : index
    %0 = vector.load %arg5[%c0, %c0_0] : memref<64x16xbf16, #tpu.memory_space<vmem>>, vector<64x16xbf16>
    %c0_1 = arith.constant 0 : index
    %c0_2 = arith.constant 0 : index
    %1 = vector.load %arg1[%c0_1, %c0_2] : memref<16x128xbf16, #tpu.memory_space<vmem>>, vector<16x128xbf16>
    %cst = arith.constant dense<0.000000e+00> : vector<64x128xf32>
    %2 = tpu.matmul %0, %1, %cst {dimension_numbers = #tpu.dot_dimension_numbers<[1], [0], [0], [1], [0, 0, 1, 1], [], []>} : vector<64x16xbf16>, vector<16x128xbf16>, vector<64x128xf32> -> vector<64x128xf32>
    %c0_3 = arith.constant 0 : index
    %c0_4 = arith.constant 0 : index
    %3 = vector.load %arg6[%c0_3, %c0_4] : memref<64x16xbf16, #tpu.memory_space<vmem>>, vector<64x16xbf16>
    %c0_5 = arith.constant 0 : index
    %c0_6 = arith.constant 0 : index
    %4 = vector.load %arg2[%c0_5, %c0_6] : memref<16x128xbf16, #tpu.memory_space<vmem>>, vector<16x128xbf16>
    %cst_7 = arith.constant dense<0.000000e+00> : vector<64x128xf32>
    %5 = tpu.matmul %3, %4, %cst_7 {dimension_numbers = #tpu.dot_dimension_numbers<[1], [0], [0], [1], [0, 0, 1, 1], [], []>} : vector<64x16xbf16>, vector<16x128xbf16>, vector<64x128xf32> -> vector<64x128xf32>
    %6 = arith.addf %2, %5 : vector<64x128xf32>
    %c0_8 = arith.constant 0 : index
    %c0_9 = arith.constant 0 : index
    %7 = vector.load %arg7[%c0_8, %c0_9] : memref<64x1xf32, #tpu.memory_space<vmem>>, vector<64x1xf32>
    %8 = vector.broadcast %7 : vector<64x1xf32> to vector<64x128xf32>
    %9 = arith.addf %6, %8 : vector<64x128xf32>
    %cst_10 = arith.constant 0.000000e+00 : f32
    %10 = vector.broadcast %cst_10 : f32 to vector<64x128xf32>
    %11 = arith.maximumf %9, %10 : vector<64x128xf32>
    %c0_11 = arith.constant 0 : index
    %c0_12 = arith.constant 0 : index
    %12 = vector.load %arg8[%c0_11, %c0_12] : memref<32x64xbf16, #tpu.memory_space<vmem>>, vector<32x64xbf16>
    %13 = arith.truncf %11 : vector<64x128xf32> to vector<64x128xbf16>
    %cst_13 = arith.constant dense<0.000000e+00> : vector<32x128xf32>
    %14 = tpu.matmul %12, %13, %cst_13 {dimension_numbers = #tpu.dot_dimension_numbers<[1], [0], [0], [1], [0, 0, 1, 1], [], []>} : vector<32x64xbf16>, vector<64x128xbf16>, vector<32x128xf32> -> vector<32x128xf32>
    %c0_14 = arith.constant 0 : index
    %c0_15 = arith.constant 0 : index
    %15 = vector.load %arg9[%c0_14, %c0_15] : memref<32x1xf32, #tpu.memory_space<vmem>>, vector<32x1xf32>
    %16 = vector.broadcast %15 : vector<32x1xf32> to vector<32x128xf32>
    %17 = arith.addf %14, %16 : vector<32x128xf32>
    %cst_16 = arith.constant 0.000000e+00 : f32
    %18 = vector.broadcast %cst_16 : f32 to vector<32x128xf32>
    %19 = arith.maximumf %17, %18 : vector<32x128xf32>
    %c0_17 = arith.constant 0 : index
    %c0_18 = arith.constant 0 : index
    %20 = vector.load %arg10[%c0_17, %c0_18] : memref<16x32xbf16, #tpu.memory_space<vmem>>, vector<16x32xbf16>
    %21 = arith.truncf %19 : vector<32x128xf32> to vector<32x128xbf16>
    %cst_19 = arith.constant dense<0.000000e+00> : vector<16x128xf32>
    %22 = tpu.matmul %20, %21, %cst_19 {dimension_numbers = #tpu.dot_dimension_numbers<[1], [0], [0], [1], [0, 0, 1, 1], [], []>} : vector<16x32xbf16>, vector<32x128xbf16>, vector<16x128xf32> -> vector<16x128xf32>
    %c0_20 = arith.constant 0 : index
    %c0_21 = arith.constant 0 : index
    %23 = vector.load %arg11[%c0_20, %c0_21] : memref<16x1xf32, #tpu.memory_space<vmem>>, vector<16x1xf32>
    %24 = vector.broadcast %23 : vector<16x1xf32> to vector<16x128xf32>
    %25 = arith.addf %22, %24 : vector<16x128xf32>
    %cst_22 = arith.constant 0.000000e+00 : f32
    %26 = vector.broadcast %cst_22 : f32 to vector<16x128xf32>
    %27 = arith.maximumf %25, %26 : vector<16x128xf32>
    %c0_23 = arith.constant 0 : index
    %c0_24 = arith.constant 0 : index
    %28 = vector.load %arg3[%c0_23, %c0_24] : memref<8x128xf32, #tpu.memory_space<vmem>>, vector<8x128xf32>
    %c0_25 = arith.constant 0 : index
    %c0_26 = arith.constant 0 : index
    %29 = vector.load %arg4[%c0_25, %c0_26] : memref<8x128xf32, #tpu.memory_space<vmem>>, vector<8x128xf32>
    %30 = arith.mulf %28, %29 : vector<8x128xf32>
    %c0_27 = arith.constant 0 : index
    %c0_28 = arith.constant 0 : index
    %31 = vector.load %arg12[%c0_27, %c0_28] : memref<16x1xf32, #tpu.memory_space<vmem>>, vector<16x1xf32>
    %32 = vector.broadcast %31 : vector<16x1xf32> to vector<16x128xf32>
    %33 = arith.mulf %27, %32 : vector<16x128xf32>
    %cst_29 = arith.constant dense<0.000000e+00> : vector<128xf32>
    %34 = vector.multi_reduction <add>, %33, %cst_29 [0] : vector<16x128xf32> to vector<128xf32>
    %35 = vector.shape_cast %34 : vector<128xf32> to vector<1x128xf32>
    %c0_30 = arith.constant 0 : index
    %c0_31 = arith.constant 0 : index
    %36 = vector.load %arg13[%c0_30, %c0_31] : memref<8x1xf32, #tpu.memory_space<vmem>>, vector<8x1xf32>
    %37 = vector.broadcast %36 : vector<8x1xf32> to vector<8x128xf32>
    %38 = arith.mulf %30, %37 : vector<8x128xf32>
    %cst_32 = arith.constant dense<0.000000e+00> : vector<128xf32>
    %39 = vector.multi_reduction <add>, %38, %cst_32 [0] : vector<8x128xf32> to vector<128xf32>
    %40 = vector.shape_cast %39 : vector<128xf32> to vector<1x128xf32>
    %41 = arith.addf %35, %40 : vector<1x128xf32>
    %c0_33 = arith.constant 0 : index
    %c0_34 = arith.constant 0 : index
    %42 = vector.load %arg14[%c0_33, %c0_34] : memref<1x1xf32, #tpu.memory_space<vmem>>, vector<1x1xf32>
    %43 = vector.broadcast %42 : vector<1x1xf32> to vector<1x128xf32>
    %44 = arith.addf %41, %43 : vector<1x128xf32>
    %45 = arith.negf %44 : vector<1x128xf32>
    %46 = math.exp %45 : vector<1x128xf32>
    %cst_35 = arith.constant 1.000000e+00 : f32
    %47 = vector.broadcast %cst_35 : f32 to vector<1x128xf32>
    %48 = arith.addf %47, %46 : vector<1x128xf32>
    %49 = arith.divf %47, %48 : vector<1x128xf32>
    %c0_36 = arith.constant 0 : index
    %c0_37 = arith.constant 0 : index
    %50 = vector.load %arg15[%c0_36, %c0_37] : memref<1x128xf32, #tpu.memory_space<vmem>>, vector<1x128xf32>
    tpu.vector_store %arg15[%c0_36, %c0_37], %49 {strides = array<i32>} : memref<1x128xf32, #tpu.memory_space<vmem>>, vector<1x128xf32>,
    return
  }
  func.func @transform_0(%arg0: i32) -> (i32, i32) {
    %c0_i32 = arith.constant 0 : i32
    %c0_i32_0 = arith.constant 0 : i32
    return %c0_i32, %arg0 : i32, i32
  }
  func.func @transform_1(%arg0: i32) -> (i32, i32) {
    %c0_i32 = arith.constant 0 : i32
    %c0_i32_0 = arith.constant 0 : i32
    return %c0_i32, %arg0 : i32, i32
  }
  func.func @transform_2(%arg0: i32) -> (i32, i32) {
    %c0_i32 = arith.constant 0 : i32
    %c0_i32_0 = arith.constant 0 : i32
    return %c0_i32, %arg0 : i32, i32
  }
  func.func @transform_3(%arg0: i32) -> (i32, i32) {
    %c0_i32 = arith.constant 0 : i32
    %c0_i32_0 = arith.constant 0 : i32
    return %c0_i32, %arg0 : i32, i32
  }
  func.func @transform_4(%arg0: i32) -> (i32, i32) {
    %c0_i32 = arith.constant 0 : i32
    %c0_i32_0 = arith.constant 0 : i32
    %c0_i32_1 = arith.constant 0 : i32
    return %c0_i32, %c0_i32_0 : i32, i32
  }
  func.func @transform_5(%arg0: i32) -> (i32, i32) {
    %c0_i32 = arith.constant 0 : i32
    %c0_i32_0 = arith.constant 0 : i32
    %c0_i32_1 = arith.constant 0 : i32
    return %c0_i32, %c0_i32_0 : i32, i32
  }
  func.func @transform_6(%arg0: i32) -> (i32, i32) {
    %c0_i32 = arith.constant 0 : i32
    %c0_i32_0 = arith.constant 0 : i32
    %c0_i32_1 = arith.constant 0 : i32
    return %c0_i32, %c0_i32_0 : i32, i32
  }
  func.func @transform_7(%arg0: i32) -> (i32, i32) {
    %c0_i32 = arith.constant 0 : i32
    %c0_i32_0 = arith.constant 0 : i32
    %c0_i32_1 = arith.constant 0 : i32
    return %c0_i32, %c0_i32_0 : i32, i32
  }
  func.func @transform_8(%arg0: i32) -> (i32, i32) {
    %c0_i32 = arith.constant 0 : i32
    %c0_i32_0 = arith.constant 0 : i32
    %c0_i32_1 = arith.constant 0 : i32
    return %c0_i32, %c0_i32_0 : i32, i32
  }
  func.func @transform_9(%arg0: i32) -> (i32, i32) {
    %c0_i32 = arith.constant 0 : i32
    %c0_i32_0 = arith.constant 0 : i32
    %c0_i32_1 = arith.constant 0 : i32
    return %c0_i32, %c0_i32_0 : i32, i32
  }
  func.func @transform_10(%arg0: i32) -> (i32, i32) {
    %c0_i32 = arith.constant 0 : i32
    %c0_i32_0 = arith.constant 0 : i32
    %c0_i32_1 = arith.constant 0 : i32
    return %c0_i32, %c0_i32_0 : i32, i32
  }
  func.func @transform_11(%arg0: i32) -> (i32, i32) {
    %c0_i32 = arith.constant 0 : i32
    %c0_i32_0 = arith.constant 0 : i32
    %c0_i32_1 = arith.constant 0 : i32
    return %c0_i32, %c0_i32_0 : i32, i32
  }
  func.func @transform_12(%arg0: i32) -> (i32, i32) {
    %c0_i32 = arith.constant 0 : i32
    %c0_i32_0 = arith.constant 0 : i32
    %c0_i32_1 = arith.constant 0 : i32
    return %c0_i32, %c0_i32_0 : i32, i32
  }
  func.func @transform_13(%arg0: i32) -> (i32, i32) {
    %c0_i32 = arith.constant 0 : i32
    %c0_i32_0 = arith.constant 0 : i32
    %c0_i32_1 = arith.constant 0 : i32
    return %c0_i32, %c0_i32_0 : i32, i32
  }
  func.func @transform_14(%arg0: i32) -> (i32, i32) {
    %c0_i32 = arith.constant 0 : i32
    %c0_i32_0 = arith.constant 0 : i32
    return %c0_i32, %arg0 : i32, i32
  }
}

</mosaic_0001>

<llo_original>
// kernel: tpu_custom_call.1
$region0: #{tpu_custom_call.1}
  #allocation0 [shape = 'u32[]', space=smem, size = 0x4, offset = 0x4, fixed_abs, tag = 'smem constant byte address 0x4 - core index']
  #allocation1 [shape = 'u32[144,128]{1,0:T(1,128)}', space=vmem, size = 0x12000, scoped, tag = 'internal scratch']
  #allocation2 [shape = 'f32[1,1]{1,0:T(1,128)S(1)}', space=vmem, size = 0x200, scoped, tag = 'scoped memory for tpu_custom_call.1']
  %s0 = inlined_call_operand.vmem [shape: bf16[16,128], index: 0, kind: input, shape index: {}]
  %s1 = inlined_call_operand.vmem [shape: bf16[16,128], index: 1, kind: input, shape index: {}]
  %s2 = inlined_call_operand.vmem [shape: f32[8,128], index: 2, kind: input, shape index: {}]
  %s3 = inlined_call_operand.vmem [shape: f32[8,128], index: 3, kind: input, shape index: {}]
  %s4 = inlined_call_operand.vmem [shape: bf16[64,16], index: 4, kind: input, shape index: {}]
  %s5 = inlined_call_operand.vmem [shape: bf16[64,16], index: 5, kind: input, shape index: {}]
  %s6 = inlined_call_operand.vmem [shape: f32[64,1], index: 6, kind: input, shape index: {}]
  %s7 = inlined_call_operand.vmem [shape: bf16[32,64], index: 7, kind: input, shape index: {}]
  %s8 = inlined_call_operand.vmem [shape: f32[32,1], index: 8, kind: input, shape index: {}]
  %s9 = inlined_call_operand.vmem [shape: bf16[16,32], index: 9, kind: input, shape index: {}]
  %s10 = inlined_call_operand.vmem [shape: f32[16,1], index: 10, kind: input, shape index: {}]
  %s11 = inlined_call_operand.vmem [shape: f32[16,1], index: 11, kind: input, shape index: {}]
  %s12 = inlined_call_operand.vmem [shape: f32[8,1], index: 12, kind: input, shape index: {}]
  %s13 = inlined_call_operand.<no memory space> [shape: f32[1,1], index: 13, kind: input, shape index: {}]
  %s14 = inlined_call_operand.hbm [shape: f32[1,128], index: 14, kind: output, shape index: {}]
  %s15 = sld [smem:[#allocation0]]
  $region66: #{tpu_custom_call.1} parent=0
    _
  %s17 = ssub.s32 1, %s15
  %s18 = scalar_select 0, %s17, %s15
  %v19 = vstv %s13
  %20 = vst [vmem:[#allocation2] sm:$0x1] %v19
  $region1: #{tpu_custom_call.1} parent=0
    #allocation3 [shape = 'u8[512]{0}', space=vmem, size = 0x400, scoped, tag = 'output window, operand 0, single buffered']
    #allocation4 [shape = 's32[1]{0}', space=sflag, size = 0x4, scoped, tag = 'scoped memory for tpu_custom_call.1']
    %21 = vsyncpa [#allocation4], 0
    // Predicated region
    $region2: #{tpu_custom_call.1} parent=1 // pred_check
      _
    $region3: #{tpu_custom_call.1} parent=1 // pred_check_branch
      %23 = sbr.rel (0) target = $region5
    $region4: #{tpu_custom_call.1} parent=1 // pred_region
      _
    $region5: #{tpu_custom_call.1} parent=1 // pred_fallthru
      _
    // Predicated region
    $region6: #{tpu_custom_call.1} parent=1 // pred_check
      _
    $region7: #{tpu_custom_call.1} parent=1 // pred_check_branch
      %25 = sbr.rel (0) target = $region9
    $region8: #{tpu_custom_call.1} parent=1 // pred_region
      _
    $region9: #{tpu_custom_call.1} parent=1 // pred_fallthru
      _
    // Predicated region
    $region10: #{tpu_custom_call.1} parent=1 // pred_check
      _
    $region11: #{tpu_custom_call.1} parent=1 // pred_check_branch
      %27 = sbr.rel (0) target = $region13
    $region12: #{tpu_custom_call.1} parent=1 // pred_region
      _
    $region13: #{tpu_custom_call.1} parent=1 // pred_fallthru
      _
    // Predicated region
    $region14: #{tpu_custom_call.1} parent=1 // pred_check
      _
    $region15: #{tpu_custom_call.1} parent=1 // pred_check_branch
      %29 = sbr.rel (0) target = $region17
    $region16: #{tpu_custom_call.1} parent=1 // pred_region
      _
    $region17: #{tpu_custom_call.1} parent=1 // pred_fallthru
      _
    // Predicated region
    $region18: #{tpu_custom_call.1} parent=1 // pred_check
      _
    $region19: #{tpu_custom_call.1} parent=1 // pred_check_branch
      %31 = sbr.rel (0) target = $region21
    $region20: #{tpu_custom_call.1} parent=1 // pred_region
      _
    $region21: #{tpu_custom_call.1} parent=1 // pred_fallthru
      _
    // Predicated region
    $region22: #{tpu_custom_call.1} parent=1 // pred_check
      _
    $region23: #{tpu_custom_call.1} parent=1 // pred_check_branch
      %33 = sbr.rel (0) target = $region25
    $region24: #{tpu_custom_call.1} parent=1 // pred_region
      _
    $region25: #{tpu_custom_call.1} parent=1 // pred_fallthru
      _
    // Predicated region
    $region26: #{tpu_custom_call.1} parent=1 // pred_check
      _
    $region27: #{tpu_custom_call.1} parent=1 // pred_check_branch
      %35 = sbr.rel (0) target = $region29
    $region28: #{tpu_custom_call.1} parent=1 // pred_region
      _
    $region29: #{tpu_custom_call.1} parent=1 // pred_fallthru
      _
    // Predicated region
    $region30: #{tpu_custom_call.1} parent=1 // pred_check
      _
    $region31: #{tpu_custom_call.1} parent=1 // pred_check_branch
      %37 = sbr.rel (0) target = $region33
    $region32: #{tpu_custom_call.1} parent=1 // pred_region
      _
    $region33: #{tpu_custom_call.1} parent=1 // pred_fallthru
      _
    // Predicated region
    $region34: #{tpu_custom_call.1} parent=1 // pred_check
      _
    $region35: #{tpu_custom_call.1} parent=1 // pred_check_branch
      %39 = sbr.rel (0) target = $region37
    $region36: #{tpu_custom_call.1} parent=1 // pred_region
      _
    $region37: #{tpu_custom_call.1} parent=1 // pred_fallthru
      _
    // Predicated region
    $region38: #{tpu_custom_call.1} parent=1 // pred_check
      _
    $region39: #{tpu_custom_call.1} parent=1 // pred_check_branch
      %41 = sbr.rel (0) target = $region41
    $region40: #{tpu_custom_call.1} parent=1 // pred_region
      _
    $region41: #{tpu_custom_call.1} parent=1 // pred_fallthru
      _
    // Predicated region
    $region42: #{tpu_custom_call.1} parent=1 // pred_check
      _
    $region43: #{tpu_custom_call.1} parent=1 // pred_check_branch
      %43 = sbr.rel (0) target = $region45
    $region44: #{tpu_custom_call.1} parent=1 // pred_region
      _
    $region45: #{tpu_custom_call.1} parent=1 // pred_fallthru
      _
    // Predicated region
    $region46: #{tpu_custom_call.1} parent=1 // pred_check
      _
    $region47: #{tpu_custom_call.1} parent=1 // pred_check_branch
      %45 = sbr.rel (0) target = $region49
    $region48: #{tpu_custom_call.1} parent=1 // pred_region
      _
    $region49: #{tpu_custom_call.1} parent=1 // pred_fallthru
      _
    // Predicated region
    $region50: #{tpu_custom_call.1} parent=1 // pred_check
      _
    $region51: #{tpu_custom_call.1} parent=1 // pred_check_branch
      %47 = sbr.rel (0) target = $region53
    $region52: #{tpu_custom_call.1} parent=1 // pred_region
      _
    $region53: #{tpu_custom_call.1} parent=1 // pred_fallthru
      _
    // Predicated region
    $region54: #{tpu_custom_call.1} parent=1 // pred_check
      _
    $region55: #{tpu_custom_call.1} parent=1 // pred_check_branch
      %49 = sbr.rel (0) target = $region57
    $region56: #{tpu_custom_call.1} parent=1 // pred_region
      _
    $region57: #{tpu_custom_call.1} parent=1 // pred_fallthru
      _
    %v51 = vld [vmem:[%s4] sm:$0xf]
    %v52 = vld [vmem:[%s4 + $0x4] sm:$0xf]
    %v53 = vld [vmem:[%s4 + $0x8] sm:$0xf]
    %v54 = vld [vmem:[%s4 + $0xc] sm:$0xf]
    %v55 = vld [vmem:[%s4 + $0x10] sm:$0xf]
    %v56 = vld [vmem:[%s4 + $0x14] sm:$0xf]
    %v57 = vld [vmem:[%s4 + $0x18] sm:$0xf]
    %v58 = vld [vmem:[%s4 + $0x1c] sm:$0xf]
    %v59 = vld [vmem:[%s0] sm:$0xf]
    %v60 = vld [vmem:[%s0 + $0x4] sm:$0xf]
    %v61 = vld [vmem:[%s5] sm:$0xf]
    %v62 = vld [vmem:[%s5 + $0x4] sm:$0xf]
    %v63 = vld [vmem:[%s5 + $0x8] sm:$0xf]
    %v64 = vld [vmem:[%s5 + $0xc] sm:$0xf]
    %v65 = vld [vmem:[%s5 + $0x10] sm:$0xf]
    %v66 = vld [vmem:[%s5 + $0x14] sm:$0xf]
    %v67 = vld [vmem:[%s5 + $0x18] sm:$0xf]
    %v68 = vld [vmem:[%s5 + $0x1c] sm:$0xf]
    %v69 = vld [vmem:[%s1] sm:$0xf]
    %v70 = vld [vmem:[%s1 + $0x4] sm:$0xf]
    %v79 = vunpack.c.l.b16 %v61
    %v80 = vunpack.c.l.b16 %v62
    %v81 = vunpack.c.l.b16 %v63
    %v82 = vunpack.c.l.b16 %v64
    %v83 = vunpack.c.l.b16 %v65
    %v84 = vunpack.c.l.b16 %v66
    %v85 = vunpack.c.l.b16 %v67
    %v86 = vunpack.c.l.b16 %v68
    %v87 = vpack.c.b16 %v80, %v79
    %v88 = vpack.c.b16 %v82, %v81
    %v89 = vpack.c.b16 %v84, %v83
    %v90 = vpack.c.b16 %v86, %v85
    %v93 = vunpack.c.l.b16 %v69
    %v94 = vunpack.c.l.b16 %v70
    %v95 = vpack.c.b16 %v94, %v93
    %vm97 = vcmask 130048
    %v99 = vsel %vm97, %v87, 0
    %v102 = vsel %vm97, %v88, 0
    %v105 = vsel %vm97, %v89, 0
    %v108 = vsel %vm97, %v90, 0
    %110 = vmatprep.subr.bf16.mxu0 0
    %111 = vmatpush1.bf16.msra.mxu0 0
    %112 = vmatprep.subr.bf16.mxu0 0
    %113 = vmatpush1.bf16.msra.mxu0 0
    %114 = vmatprep.subr.bf16.mxu0 0
    %115 = vmatpush1.bf16.msra.mxu0 0
    %116 = vmatprep.subr.bf16.mxu0 0
    %117 = vmatpush1.bf16.msra.mxu0 0
    %118 = vmatprep.subr.bf16.mxu0 0
    %119 = vmatpush1.bf16.msra.mxu0 0
    %120 = vmatprep.subr.bf16.mxu0 0
    %121 = vmatpush1.bf16.msra.mxu0 0
    %122 = vmatprep.subr.bf16.mxu0 0
    %123 = vmatpush1.bf16.msra.mxu0 0
    %124 = vmatprep.subr.bf16.mxu0 0
    %125 = vmatpush1.bf16.msra.mxu0 %v95
    %126 = vmatprep.subr.bf16.mxu0 0
    %127 = vmatpush2.bf16.msra.mxu0 0
    %128 = vmatprep.subr.bf16.mxu0 0
    %129 = vmatpush2.bf16.msra.mxu0 0
    %130 = vmatprep.subr.bf16.mxu0 0
    %131 = vmatpush2.bf16.msra.mxu0 0
    %132 = vmatprep.subr.bf16.mxu0 0
    %133 = vmatpush2.bf16.msra.mxu0 0
    %134 = vmatprep.subr.bf16.mxu0 0
    %135 = vmatpush2.bf16.msra.mxu0 0
    %136 = vmatprep.subr.bf16.mxu0 0
    %137 = vmatpush2.bf16.msra.mxu0 0
    %138 = vmatprep.subr.bf16.mxu0 0
    %139 = vmatpush2.bf16.msra.mxu0 0
    %140 = vmatprep.subr.bf16.mxu0 0
    %141 = vmatpush2.bf16.msra.mxu0 0
    %142 = vmatprep.mubr.bf16.mxu0 0
    %143 = vmatmul.mubr.bf16.gmra.mxu0 %v99
    %v144 = vpop.f32.mrf.mxu0
    %v145 = vadd.f32 0.0, %v144
    %v146 = vpop.f32.mrf.mxu0
    %v147 = vpop.f32.mrf.mxu0
    %v148 = vadd.f32 0.0, %v147
    %v149 = vpop.f32.mrf.mxu0
    %150 = vmatprep.mubr.bf16.mxu0 0
    %151 = vmatmul.mubr.bf16.gmra.mxu0 %v102
    %v152 = vpop.f32.mrf.mxu0
    %v153 = vadd.f32 0.0, %v152
    %v154 = vpop.f32.mrf.mxu0
    %v155 = vpop.f32.mrf.mxu0
    %v156 = vadd.f32 0.0, %v155
    %v157 = vpop.f32.mrf.mxu0
    %158 = vmatprep.mubr.bf16.mxu0 0
    %159 = vmatmul.mubr.bf16.gmra.mxu0 %v105
    %v160 = vpop.f32.mrf.mxu0
    %v161 = vadd.f32 0.0, %v160
    %v162 = vpop.f32.mrf.mxu0
    %v163 = vpop.f32.mrf.mxu0
    %v164 = vadd.f32 0.0, %v163
    %v165 = vpop.f32.mrf.mxu0
    %166 = vmatprep.mubr.bf16.mxu0 0
    %167 = vmatmul.mubr.bf16.gmra.mxu0 %v108
    %v168 = vpop.f32.mrf.mxu0
    %v169 = vadd.f32 0.0, %v168
    %v170 = vpop.f32.mrf.mxu0
    %v171 = vpop.f32.mrf.mxu0
    %v172 = vadd.f32 0.0, %v171
    %v173 = vpop.f32.mrf.mxu0
    %174 = vdwg.mxu0
    %v183 = vunpack.c.l.b16 %v51
    %v184 = vunpack.c.l.b16 %v52
    %v185 = vunpack.c.l.b16 %v53
    %v186 = vunpack.c.l.b16 %v54
    %v187 = vunpack.c.l.b16 %v55
    %v188 = vunpack.c.l.b16 %v56
    %v189 = vunpack.c.l.b16 %v57
    %v190 = vunpack.c.l.b16 %v58
    %v191 = vpack.c.b16 %v184, %v183
    %v192 = vpack.c.b16 %v186, %v185
    %v193 = vpack.c.b16 %v188, %v187
    %v194 = vpack.c.b16 %v190, %v189
    %v197 = vunpack.c.l.b16 %v59
    %v198 = vunpack.c.l.b16 %v60
    %v199 = vpack.c.b16 %v198, %v197
    %v202 = vsel %vm97, %v191, 0
    %v205 = vsel %vm97, %v192, 0
    %v208 = vsel %vm97, %v193, 0
    %v211 = vsel %vm97, %v194, 0
    %213 = vmatprep.subr.bf16.mxu0 0
    %214 = vmatpush1.bf16.msra.mxu0 0
    %215 = vmatprep.subr.bf16.mxu0 0
    %216 = vmatpush1.bf16.msra.mxu0 0
    %217 = vmatprep.subr.bf16.mxu0 0
    %218 = vmatpush1.bf16.msra.mxu0 0
    %219 = vmatprep.subr.bf16.mxu0 0
    %220 = vmatpush1.bf16.msra.mxu0 0
    %221 = vmatprep.subr.bf16.mxu0 0
    %222 = vmatpush1.bf16.msra.mxu0 0
    %223 = vmatprep.subr.bf16.mxu0 0
    %224 = vmatpush1.bf16.msra.mxu0 0
    %225 = vmatprep.subr.bf16.mxu0 0
    %226 = vmatpush1.bf16.msra.mxu0 0
    %227 = vmatprep.subr.bf16.mxu0 0
    %228 = vmatpush1.bf16.msra.mxu0 %v199
    %229 = vmatprep.subr.bf16.mxu0 0
    %230 = vmatpush2.bf16.msra.mxu0 0
    %231 = vmatprep.subr.bf16.mxu0 0
    %232 = vmatpush2.bf16.msra.mxu0 0
    %233 = vmatprep.subr.bf16.mxu0 0
    %234 = vmatpush2.bf16.msra.mxu0 0
    %235 = vmatprep.subr.bf16.mxu0 0
    %236 = vmatpush2.bf16.msra.mxu0 0
    %237 = vmatprep.subr.bf16.mxu0 0
    %238 = vmatpush2.bf16.msra.mxu0 0
    %239 = vmatprep.subr.bf16.mxu0 0
    %240 = vmatpush2.bf16.msra.mxu0 0
    %241 = vmatprep.subr.bf16.mxu0 0
    %242 = vmatpush2.bf16.msra.mxu0 0
    %243 = vmatprep.subr.bf16.mxu0 0
    %244 = vmatpush2.bf16.msra.mxu0 0
    %245 = vmatprep.mubr.bf16.mxu0 0
    %246 = vmatmul.mubr.bf16.gmra.mxu0 %v202
    %v247 = vpop.f32.mrf.mxu0
    %v248 = vadd.f32 %v145, %v247
    %v249 = vpop.f32.mrf.mxu0
    %v250 = vpop.f32.mrf.mxu0
    %v251 = vadd.f32 %v148, %v250
    %v252 = vpop.f32.mrf.mxu0
    %253 = vmatprep.mubr.bf16.mxu0 0
    %254 = vmatmul.mubr.bf16.gmra.mxu0 %v205
    %v255 = vpop.f32.mrf.mxu0
    %v256 = vadd.f32 %v153, %v255
    %v257 = vpop.f32.mrf.mxu0
    %v258 = vpop.f32.mrf.mxu0
    %v259 = vadd.f32 %v156, %v258
    %v260 = vpop.f32.mrf.mxu0
    %261 = vmatprep.mubr.bf16.mxu0 0
    %262 = vmatmul.mubr.bf16.gmra.mxu0 %v208
    %v263 = vpop.f32.mrf.mxu0
    %v264 = vadd.f32 %v161, %v263
    %v265 = vpop.f32.mrf.mxu0
    %v266 = vpop.f32.mrf.mxu0
    %v267 = vadd.f32 %v164, %v266
    %v268 = vpop.f32.mrf.mxu0
    %269 = vmatprep.mubr.bf16.mxu0 0
    %270 = vmatmul.mubr.bf16.gmra.mxu0 %v211
    %v271 = vpop.f32.mrf.mxu0
    %v272 = vadd.f32 %v169, %v271
    %v273 = vpop.f32.mrf.mxu0
    %v274 = vpop.f32.mrf.mxu0
    %v275 = vadd.f32 %v172, %v274
    %v276 = vpop.f32.mrf.mxu0
    %277 = vdwg.mxu0
    %v278 = vld [vmem:[%s6] sm:$0xff]
    %v279 = vld [vmem:[%s6 + $0x8] sm:$0xff]
    %v280 = vld [vmem:[%s6 + $0x10] sm:$0xff]
    %v281 = vld [vmem:[%s6 + $0x18] sm:$0xff]
    %v282 = vld [vmem:[%s6 + $0x20] sm:$0xff]
    %v283 = vld [vmem:[%s6 + $0x28] sm:$0xff]
    %v284 = vld [vmem:[%s6 + $0x30] sm:$0xff]
    %v285 = vld [vmem:[%s6 + $0x38] sm:$0xff]
    %287 = vset.pattern.permute.xlu0 0
    %288 = vperm.xlu0 %287, %v278
    %v289 = vpop.permute.xlu0 %288
    %292 = vset.pattern.permute.xlu0 0
    %293 = vperm.xlu0 %292, %v279
    %v294 = vpop.permute.xlu0 %293
    %297 = vset.pattern.permute.xlu0 0
    %298 = vperm.xlu0 %297, %v280
    %v299 = vpop.permute.xlu0 %298
    %302 = vset.pattern.permute.xlu0 0
    %303 = vperm.xlu0 %302, %v281
    %v304 = vpop.permute.xlu0 %303
    %307 = vset.pattern.permute.xlu0 0
    %308 = vperm.xlu0 %307, %v282
    %v309 = vpop.permute.xlu0 %308
    %312 = vset.pattern.permute.xlu0 0
    %313 = vperm.xlu0 %312, %v283
    %v314 = vpop.permute.xlu0 %313
    %317 = vset.pattern.permute.xlu0 0
    %318 = vperm.xlu0 %317, %v284
    %v319 = vpop.permute.xlu0 %318
    %322 = vset.pattern.permute.xlu0 0
    %323 = vperm.xlu0 %322, %v285
    %v324 = vpop.permute.xlu0 %323
    %v326 = vadd.f32 %v248, %v289
    %v327 = vadd.f32 %v251, %v294
    %v328 = vadd.f32 %v256, %v299
    %v329 = vadd.f32 %v259, %v304
    %v330 = vadd.f32 %v264, %v309
    %v331 = vadd.f32 %v267, %v314
    %v332 = vadd.f32 %v272, %v319
    %v333 = vadd.f32 %v275, %v324
    %v334 = vmax.f32 %v326, 0.0
    %v335 = vmax.f32 %v327, 0.0
    %v336 = vmax.f32 %v328, 0.0
    %v337 = vmax.f32 %v329, 0.0
    %v338 = vmax.f32 %v330, 0.0
    %v339 = vmax.f32 %v331, 0.0
    %v340 = vmax.f32 %v332, 0.0
    %v341 = vmax.f32 %v333, 0.0
    %v342 = vld [vmem:[%s7] sm:$0xf]
    %v343 = vld [vmem:[%s7 + $0x4] sm:$0xf]
    %v344 = vld [vmem:[%s7 + $0x8] sm:$0xf]
    %v345 = vld [vmem:[%s7 + $0xc] sm:$0xf]
    %v346 = vpack.c.bf16 %v335, %v334
    %v347 = vpack.c.bf16 %v337, %v336
    %v348 = vpack.c.bf16 %v339, %v338
    %v349 = vpack.c.bf16 %v341, %v340
    %v350 = vld [vmem:[%s8] sm:$0xff]
    %v351 = vld [vmem:[%s8 + $0x8] sm:$0xff]
    %v352 = vld [vmem:[%s8 + $0x10] sm:$0xff]
    %v353 = vld [vmem:[%s8 + $0x18] sm:$0xff]
    %355 = vset.pattern.permute.xlu0 0
    %356 = vperm.xlu0 %355, %v350
    %v357 = vpop.permute.xlu0 %356
    %360 = vset.pattern.permute.xlu0 0
    %361 = vperm.xlu0 %360, %v351
    %v362 = vpop.permute.xlu0 %361
    %365 = vset.pattern.permute.xlu0 0
    %366 = vperm.xlu0 %365, %v352
    %v367 = vpop.permute.xlu0 %366
    %370 = vset.pattern.permute.xlu0 0
    %371 = vperm.xlu0 %370, %v353
    %v372 = vpop.permute.xlu0 %371
    %v378 = vunpack.c.l.b16 %v342
    %v379 = vunpack.c.l.b16 %v343
    %v380 = vunpack.c.l.b16 %v344
    %v381 = vunpack.c.l.b16 %v345
    %v382 = vpack.c.b16 %v379, %v378
    %v383 = vpack.c.b16 %v381, %v380
    %vm384 = vcmask 523264
    %v386 = vsel %vm384, %v382, 0
    %v389 = vsel %vm384, %v383, 0
    %391 = vmatprep.subr.bf16.mxu0 0
    %392 = vmatpush1.bf16.msra.mxu0 0
    %393 = vmatprep.subr.bf16.mxu0 0
    %394 = vmatpush1.bf16.msra.mxu0 0
    %395 = vmatprep.subr.bf16.mxu0 0
    %396 = vmatpush1.bf16.msra.mxu0 0
    %397 = vmatprep.subr.bf16.mxu0 0
    %398 = vmatpush1.bf16.msra.mxu0 0
    %399 = vmatprep.subr.bf16.mxu0 0
    %400 = vmatpush1.bf16.msra.mxu0 %v349
    %401 = vmatprep.subr.bf16.mxu0 0
    %402 = vmatpush1.bf16.msra.mxu0 %v348
    %403 = vmatprep.subr.bf16.mxu0 0
    %404 = vmatpush1.bf16.msra.mxu0 %v347
    %405 = vmatprep.subr.bf16.mxu0 0
    %406 = vmatpush1.bf16.msra.mxu0 %v346
    %407 = vmatprep.subr.bf16.mxu0 0
    %408 = vmatpush2.bf16.msra.mxu0 0
    %409 = vmatprep.subr.bf16.mxu0 0
    %410 = vmatpush2.bf16.msra.mxu0 0
    %411 = vmatprep.subr.bf16.mxu0 0
    %412 = vmatpush2.bf16.msra.mxu0 0
    %413 = vmatprep.subr.bf16.mxu0 0
    %414 = vmatpush2.bf16.msra.mxu0 0
    %415 = vmatprep.subr.bf16.mxu0 0
    %416 = vmatpush2.bf16.msra.mxu0 0
    %417 = vmatprep.subr.bf16.mxu0 0
    %418 = vmatpush2.bf16.msra.mxu0 0
    %419 = vmatprep.subr.bf16.mxu0 0
    %420 = vmatpush2.bf16.msra.mxu0 0
    %421 = vmatprep.subr.bf16.mxu0 0
    %422 = vmatpush2.bf16.msra.mxu0 0
    %423 = vmatprep.mubr.bf16.mxu0 0
    %424 = vmatmul.mubr.bf16.gmra.mxu0 %v386
    %v425 = vpop.f32.mrf.mxu0
    %v426 = vadd.f32 %v357, %v425
    %v427 = vpop.f32.mrf.mxu0
    %v428 = vpop.f32.mrf.mxu0
    %v429 = vadd.f32 %v362, %v428
    %v430 = vpop.f32.mrf.mxu0
    %431 = vmatprep.mubr.bf16.mxu0 0
    %432 = vmatmul.mubr.bf16.gmra.mxu0 %v389
    %v433 = vpop.f32.mrf.mxu0
    %v434 = vadd.f32 %v367, %v433
    %v435 = vpop.f32.mrf.mxu0
    %v436 = vpop.f32.mrf.mxu0
    %v437 = vadd.f32 %v372, %v436
    %v438 = vpop.f32.mrf.mxu0
    %439 = vdwg.mxu0
    %v440 = vmax.f32 %v426, 0.0
    %v441 = vmax.f32 %v429, 0.0
    %v442 = vmax.f32 %v434, 0.0
    %v443 = vmax.f32 %v437, 0.0
    %v444 = vld [vmem:[%s9] sm:$0xf]
    %v445 = vld [vmem:[%s9 + $0x4] sm:$0xf]
    %v446 = vpack.c.bf16 %v441, %v440
    %v447 = vpack.c.bf16 %v443, %v442
    %v448 = vld [vmem:[%s10] sm:$0xff]
    %v449 = vld [vmem:[%s10 + $0x8] sm:$0xff]
    %451 = vset.pattern.permute.xlu0 0
    %452 = vperm.xlu0 %451, %v448
    %v453 = vpop.permute.xlu0 %452
    %456 = vset.pattern.permute.xlu0 0
    %457 = vperm.xlu0 %456, %v449
    %v458 = vpop.permute.xlu0 %457
    %v462 = vunpack.c.l.b16 %v444
    %v463 = vunpack.c.l.b16 %v445
    %v464 = vpack.c.b16 %v463, %v462
    %vm465 = vcmask 261120
    %v467 = vsel %vm465, %v464, 0
    %469 = vmatprep.subr.bf16.mxu0 0
    %470 = vmatpush1.bf16.msra.mxu0 0
    %471 = vmatprep.subr.bf16.mxu0 0
    %472 = vmatpush1.bf16.msra.mxu0 0
    %473 = vmatprep.subr.bf16.mxu0 0
    %474 = vmatpush1.bf16.msra.mxu0 0
    %475 = vmatprep.subr.bf16.mxu0 0
    %476 = vmatpush1.bf16.msra.mxu0 0
    %477 = vmatprep.subr.bf16.mxu0 0
    %478 = vmatpush1.bf16.msra.mxu0 0
    %479 = vmatprep.subr.bf16.mxu0 0
    %480 = vmatpush1.bf16.msra.mxu0 0
    %481 = vmatprep.subr.bf16.mxu0 0
    %482 = vmatpush1.bf16.msra.mxu0 %v447
    %483 = vmatprep.subr.bf16.mxu0 0
    %484 = vmatpush1.bf16.msra.mxu0 %v446
    %485 = vmatprep.subr.bf16.mxu0 0
    %486 = vmatpush2.bf16.msra.mxu0 0
    %487 = vmatprep.subr.bf16.mxu0 0
    %488 = vmatpush2.bf16.msra.mxu0 0
    %489 = vmatprep.subr.bf16.mxu0 0
    %490 = vmatpush2.bf16.msra.mxu0 0
    %491 = vmatprep.subr.bf16.mxu0 0
    %492 = vmatpush2.bf16.msra.mxu0 0
    %493 = vmatprep.subr.bf16.mxu0 0
    %494 = vmatpush2.bf16.msra.mxu0 0
    %495 = vmatprep.subr.bf16.mxu0 0
    %496 = vmatpush2.bf16.msra.mxu0 0
    %497 = vmatprep.subr.bf16.mxu0 0
    %498 = vmatpush2.bf16.msra.mxu0 0
    %499 = vmatprep.subr.bf16.mxu0 0
    %500 = vmatpush2.bf16.msra.mxu0 0
    %501 = vmatprep.mubr.bf16.mxu0 0
    %502 = vmatmul.mubr.bf16.gmra.mxu0 %v467
    %v503 = vpop.f32.mrf.mxu0
    %v504 = vadd.f32 %v453, %v503
    %v505 = vpop.f32.mrf.mxu0
    %v506 = vpop.f32.mrf.mxu0
    %v507 = vadd.f32 %v458, %v506
    %v508 = vpop.f32.mrf.mxu0
    %509 = vdwg.mxu0
    %v510 = vmax.f32 %v504, 0.0
    %v511 = vmax.f32 %v507, 0.0
    %v512 = vld [vmem:[%s2] sm:$0xff]
    %v513 = vld [vmem:[%s3] sm:$0xff]
    %v514 = vmul.f32 %v512, %v513
    %v515 = vld [vmem:[%s11] sm:$0xff]
    %v516 = vld [vmem:[%s11 + $0x8] sm:$0xff]
    %518 = vset.pattern.permute.xlu0 0
    %519 = vperm.xlu0 %518, %v515
    %v520 = vpop.permute.xlu0 %519
    %523 = vset.pattern.permute.xlu0 0
    %524 = vperm.xlu0 %523, %v516
    %v525 = vpop.permute.xlu0 %524
    %v527 = vmul.f32 %v510, %v520
    %v528 = vmul.f32 %v511, %v525
    %v529 = vadd.f32 %v527, %v528
    %v530 = vrot.slane %v529, 4
    %v531 = vadd.f32 %v529, %v530
    %v532 = vrot.slane %v531, 2
    %v533 = vadd.f32 %v531, %v532
    %v534 = vrot.slane %v533, 1
    %v535 = vadd.f32 %v533, %v534
    %v536 = vld [vmem:[%s12] sm:$0xff]
    %538 = vset.pattern.permute.xlu0 0
    %539 = vperm.xlu0 %538, %v536
    %v540 = vpop.permute.xlu0 %539
    %v542 = vmul.f32 %v514, %v540
    %v543 = vrot.slane %v542, 4
    %v544 = vadd.f32 %v542, %v543
    %v545 = vrot.slane %v544, 2
    %v546 = vadd.f32 %v544, %v545
    %v547 = vrot.slane %v546, 1
    %v548 = vadd.f32 %v546, %v547
    %v549 = vadd.f32 %v535, %v548
    %v550 = vld [vmem:[#allocation2] sm:$0x1]
    %552 = vset.pattern.permute.xlu0 0
    %553 = vperm.xlu0 %552, %v550
    %v554 = vpop.permute.xlu0 %553
    %v556 = vlaneseq
    %v557 = vshrl.u32 %v556, 7
    %v558 = vsub.s32 0, %v557
    %v559 = vrot.slane %v554, %v558
    %v560 = vadd.f32 %v549, %v559
    %v561 = vxor.u32 %v560, 2147483648
    %v562 = vmul.f32 %v561, 1.442695
    %v563 = vpow.pop %v562
    %v564 = vadd.f32 %v563, 1.0
    %v565 = vrcp.pop %v564
    %v566 = vmul.f32 1.0, %v565
    %567 = vst [vmem:[#allocation3] sm:$0x1] %v566
    // Predicated region
    $region58: #{tpu_custom_call.1} parent=1 // pred_check
      _
    $region59: #{tpu_custom_call.1} parent=1 // pred_check_branch
      %569 = sbr.rel (0) target = $region61
    $region60: #{tpu_custom_call.1} parent=1 // pred_region
      %s571 = ssub.s32 16, 16
      %572 = vsyncadd [#allocation4], %s571
      %s574 = sshll.u32 [#allocation3], 4
      %s575 = int_to_ptr.vmem [resolvable:$true] %s574
      %577 = dma.vmem_to_hbm [thread:$0]  %s575, 16, %s14, [#allocation4]
    $region61: #{tpu_custom_call.1} parent=1 // pred_fallthru
      _
    // Predicated region
    $region62: #{tpu_custom_call.1} parent=1 // pred_check
      _
    $region63: #{tpu_custom_call.1} parent=1 // pred_check_branch
      %579 = sbr.rel (0) target = $region65
    $region64: #{tpu_custom_call.1} parent=1 // pred_region
      %580 = dma.done [#allocation4], 16
    $region65: #{tpu_custom_call.1} parent=1 // pred_fallthru
      _
    %581 = vsyncpa [#allocation4], 1

</llo_original>
